<compile_context>
chip_gen: v7x
topology: tpu7x:2x2x1
jax: 0.10.0
libtpu: 0.0.40
codegen_flags: <defaults>
</compile_context>

<pallas_src>
import jax
import jax.numpy as jnp
from jax.experimental import pallas as pl
from jax.experimental.pallas import tpu as pltpu
import numpy as np

# ---- static problem sizes (from the module / fixed input (1,2,6,6)) ----
CIN = 2                     # conv_transpose in channels
C1 = 2                      # conv_transpose out channels
KT = 5                      # conv_transpose kernel
STRIDE = 2
C2 = 1                      # conv out channels
KC = 3                      # conv kernel
H_IN = W_IN = 6
H1 = (H_IN - 1) * STRIDE + KT            # 15  conv_transpose output
W1 = (W_IN - 1) * STRIDE + KT            # 15
H2 = H1 - KC + 1                         # 13  final output
W2 = W1 - KC + 1                         # 13
KK = KT + KC - 1                         # 7   fused (composed) kernel size

GW = 16                                  # lanes per (row-shift, channel) group
NRS = 4                                  # distinct row shifts  (0..3)
NCS = 4                                  # distinct column shifts (0..3)
PHASES = ((0, 0), (0, 1), (1, 0), (1, 1))  # (row parity, col parity), g = 2*py + px


def fused_conv_kernel(xs_ref, wv_ref, b_ref, out_ref):
    """xs_ref : VMEM (4, 8, 128)  column-shift-stacked input:
                  xs[cs, y, rs*32 + ci*16 + col] = xpad[ci, rs + y, cs + col]
       wv_ref : VMEM (16, 8, 128) per-(phase, col-shift) lane-vector weights
                  (pre-broadcast over sublanes; zero where the tap does not exist)
       b_ref  : SMEM (1,)         combined bias
       out_ref: VMEM (8, 128)     phase g result in lanes [32g, 32g+32) (duplicated x2)
    """
    X = [xs_ref[cs] for cs in range(NCS)]            # 4 aligned (8,128) tiles
    parts = []
    for g, (py, px) in enumerate(PHASES):
        acc = None
        for cs in range(px, NCS):                    # column taps of this phase
            t = wv_ref[g * NCS + cs] * X[cs]         # one FMA = 4 row taps x 2 channels
            acc = t if acc is None else acc + t
        # circular reduction over the 8 (row-shift, channel) lane groups of 16:
        # afterwards EVERY 16-lane group holds the full sum for its column offset.
        acc = acc + pltpu.roll(acc, shift=64, axis=1)
        acc = acc + pltpu.roll(acc, shift=32, axis=1)
        acc = acc + pltpu.roll(acc, shift=16, axis=1)
        parts.append(acc[:, 32 * g:32 * (g + 1)])    # keep the group at its final lanes
    merged = jnp.concatenate(parts, axis=1)          # (8, 128)
    out_ref[...] = jnp.tanh(merged + b_ref[0])       # single lane-dense store


def prepare_params(wt, bt, wc, bc):
    """Runs ONCE per weight set (hoisted out of the per-call hot path).
    wt: (CIN, C1, KT, KT) torch ConvTranspose layout; wc: (C2, C1, KC, KC) OIHW."""
    wt = jnp.asarray(wt, jnp.float32); bt = jnp.asarray(bt, jnp.float32)
    wc = jnp.asarray(wc, jnp.float32); bc = jnp.asarray(bc, jnp.float32)

    # transposed conv expressed as a direct correlation kernel
    w_eff = jnp.transpose(wt, (1, 0, 2, 3))[:, :, ::-1, ::-1]      # (C1, CIN, 5, 5)
    # compose the 5x5 and 3x3 correlations into one 7x7 kernel
    w_comb = jnp.zeros((C2, CIN, KK, KK), jnp.float32)
    for p in range(KC):
        for q in range(KC):
            contrib = jnp.einsum('om,miab->oiab', wc[:, :, p, q], w_eff)
            w_comb = w_comb.at[:, :, p:p + KT, q:q + KT].add(contrib)
    # bias folding (valid: 2nd conv is VALID, so every output sees all 9 taps of bt)
    b_comb = bc + jnp.einsum('ompq,m->o', wc, bt)                  # (C2,) = (1,)

    # per-(phase, column-shift) 128-lane weight vectors, pre-broadcast over sublanes
    wcn = np.asarray(w_comb[0])                                    # (CIN, 7, 7)
    WV = np.zeros((4 * NCS, 8, 128), np.float32)
    for g, (py, px) in enumerate(PHASES):
        for cs in range(NCS):
            b_tap = 2 * cs - px
            if b_tap < 0:
                continue
            for rs in range(NRS):
                a_tap = 2 * rs - py
                if a_tap < 0:
                    continue
                for ci in range(CIN):
                    lo = rs * 2 * GW + ci * GW
                    WV[g * NCS + cs, :, lo:lo + GW] = wcn[ci, a_tap, b_tap]
    return jnp.asarray(WV), b_comb


@jax.jit
def model_forward(x, WV, b_comb):
    """x: (1, CIN, 6, 6) NCHW. Returns (1, C2, 13, 13). WV/b_comb from prepare_params."""
    # zero-pad (2 top/left, enough bottom/right for all shifted windows)
    xpad = jnp.pad(x[0].astype(jnp.float32), ((0, 0), (2, 3), (2, 11)))   # (CIN, 11, 19)
    # lane-packed, shift-stacked slab: XS[cs, y, rs*32+ci*16+col] = xpad[ci, rs+y, cs+col]
    XS = jnp.stack(
        [jnp.stack([xpad[:, rs:rs + 8, cs:cs + GW] for rs in range(NRS)], axis=0)
         for cs in range(NCS)], axis=0)                                   # (4, 4, 2, 8, 16)
    XS = XS.transpose(0, 3, 1, 2, 4).reshape(NCS, 8, 128)

    o = pl.pallas_call(
        fused_conv_kernel,
        out_shape=jax.ShapeDtypeStruct((8, 128), jnp.float32),
        in_specs=[
            pl.BlockSpec(memory_space=pltpu.MemorySpace.VMEM),   # packed input slab
            pl.BlockSpec(memory_space=pltpu.MemorySpace.VMEM),   # lane-vector weights
            pl.BlockSpec(memory_space=pltpu.MemorySpace.SMEM),   # combined bias
        ],
        out_specs=pl.BlockSpec(memory_space=pltpu.MemorySpace.VMEM),
    )(XS, WV, b_comb)

    # single pixel-shuffle de-interleave of the four stride phases
    ph = jnp.stack([o[:7, 32 * g:32 * g + 7] for g in range(4)], axis=0)  # (4, 7, 7)
    y = ph.reshape(2, 2, 7, 7).transpose(2, 0, 3, 1).reshape(14, 14)[:H2, :W2]
    return y[None, None]                                                  # (1, C2, 13, 13)


def _reference(x, wt, bt, wc, bc):
    """Pure lax reference (unfused two-step pipeline, independent lowering)."""
    w_eff = jnp.transpose(wt, (1, 0, 2, 3))[:, :, ::-1, ::-1]
    v1 = jax.lax.conv_general_dilated(
        x, w_eff, window_strides=(1, 1),
        padding=((KT - 1, KT - 1), (KT - 1, KT - 1)),
        lhs_dilation=(STRIDE, STRIDE),
        dimension_numbers=("NCHW", "OIHW", "NCHW"),
    ) + bt.reshape(1, C1, 1, 1)
    v2 = jax.lax.conv_general_dilated(
        v1, wc, window_strides=(1, 1), padding="VALID",
        dimension_numbers=("NCHW", "OIHW", "NCHW"),
    ) + bc.reshape(1, C2, 1, 1)
    return jnp.tanh(v2)


if __name__ == "__main__":
    key = jax.random.PRNGKey(0)
    k_x, k_wt, k_bt, k_wc, k_bc = jax.random.split(key, 5)

    # Input (matches torch.randn(1, 2, 6, 6))
    x = jax.random.normal(k_x, (1, CIN, H_IN, W_IN), dtype=jnp.float32)

    # Deterministic parameter init (PyTorch-style uniform +-1/sqrt(fan_in)).
    bound_t = 1.0 / np.sqrt(CIN * KT * KT)
    wt = jax.random.uniform(k_wt, (CIN, C1, KT, KT), jnp.float32, -bound_t, bound_t)
    bt = jax.random.uniform(k_bt, (C1,), jnp.float32, -bound_t, bound_t)
    bound_c = 1.0 / np.sqrt(C1 * KC * KC)
    wc = jax.random.uniform(k_wc, (C2, C1, KC, KC), jnp.float32, -bound_c, bound_c)
    bc = jax.random.uniform(k_bc, (C2,), jnp.float32, -bound_c, bound_c)

    # One-time weight preparation (hoisted out of the forward hot path).
    WV, b_comb = prepare_params(wt, bt, wc, bc)

    out = jax.block_until_ready(model_forward(x, WV, b_comb))
    ref = jax.block_until_ready(_reference(x, wt, bt, wc, bc))

    assert out.shape == (1, C2, H2, W2), out.shape
    np.testing.assert_allclose(np.asarray(out), np.asarray(ref), atol=1e-5, rtol=1e-5)

    print("KERNEL_OK")
</pallas_src>

<mosaic_0001>
module attributes {stable_mosaic.version = 11 : i64} {
  func.func @fused_conv_kernel(%arg0: memref<4x8x128xf32, #tpu.memory_space<vmem>>, %arg1: memref<16x8x128xf32, #tpu.memory_space<vmem>>, %arg2: memref<1xf32, #tpu.memory_space<smem>>, %arg3: memref<8x128xf32, #tpu.memory_space<vmem>>) attributes {dimension_semantics = [], scalar_prefetch = 0 : i64, scratch_operands = 0 : i64, tpu.core_type = #tpu.core_type<tc>} {
    %c0 = arith.constant 0 : index
    %c0_0 = arith.constant 0 : index
    %c0_1 = arith.constant 0 : index
    %0 = vector.load %arg0[%c0, %c0_0, %c0_1] : memref<4x8x128xf32, #tpu.memory_space<vmem>>, vector<1x8x128xf32>
    %1 = vector.shape_cast %0 : vector<1x8x128xf32> to vector<8x128xf32>
    %c1 = arith.constant 1 : index
    %c0_2 = arith.constant 0 : index
    %c0_3 = arith.constant 0 : index
    %2 = vector.load %arg0[%c1, %c0_2, %c0_3] : memref<4x8x128xf32, #tpu.memory_space<vmem>>, vector<1x8x128xf32>
    %3 = vector.shape_cast %2 : vector<1x8x128xf32> to vector<8x128xf32>
    %c2 = arith.constant 2 : index
    %c0_4 = arith.constant 0 : index
    %c0_5 = arith.constant 0 : index
    %4 = vector.load %arg0[%c2, %c0_4, %c0_5] : memref<4x8x128xf32, #tpu.memory_space<vmem>>, vector<1x8x128xf32>
    %5 = vector.shape_cast %4 : vector<1x8x128xf32> to vector<8x128xf32>
    %c3 = arith.constant 3 : index
    %c0_6 = arith.constant 0 : index
    %c0_7 = arith.constant 0 : index
    %6 = vector.load %arg0[%c3, %c0_6, %c0_7] : memref<4x8x128xf32, #tpu.memory_space<vmem>>, vector<1x8x128xf32>
    %7 = vector.shape_cast %6 : vector<1x8x128xf32> to vector<8x128xf32>
    %c0_8 = arith.constant 0 : index
    %c0_9 = arith.constant 0 : index
    %c0_10 = arith.constant 0 : index
    %8 = vector.load %arg1[%c0_8, %c0_9, %c0_10] : memref<16x8x128xf32, #tpu.memory_space<vmem>>, vector<1x8x128xf32>
    %9 = vector.shape_cast %8 : vector<1x8x128xf32> to vector<8x128xf32>
    %10 = arith.mulf %9, %1 : vector<8x128xf32>
    %c1_11 = arith.constant 1 : index
    %c0_12 = arith.constant 0 : index
    %c0_13 = arith.constant 0 : index
    %11 = vector.load %arg1[%c1_11, %c0_12, %c0_13] : memref<16x8x128xf32, #tpu.memory_space<vmem>>, vector<1x8x128xf32>
    %12 = vector.shape_cast %11 : vector<1x8x128xf32> to vector<8x128xf32>
    %13 = arith.mulf %12, %3 : vector<8x128xf32>
    %14 = arith.addf %10, %13 : vector<8x128xf32>
    %c2_14 = arith.constant 2 : index
    %c0_15 = arith.constant 0 : index
    %c0_16 = arith.constant 0 : index
    %15 = vector.load %arg1[%c2_14, %c0_15, %c0_16] : memref<16x8x128xf32, #tpu.memory_space<vmem>>, vector<1x8x128xf32>
    %16 = vector.shape_cast %15 : vector<1x8x128xf32> to vector<8x128xf32>
    %17 = arith.mulf %16, %5 : vector<8x128xf32>
    %18 = arith.addf %14, %17 : vector<8x128xf32>
    %c3_17 = arith.constant 3 : index
    %c0_18 = arith.constant 0 : index
    %c0_19 = arith.constant 0 : index
    %19 = vector.load %arg1[%c3_17, %c0_18, %c0_19] : memref<16x8x128xf32, #tpu.memory_space<vmem>>, vector<1x8x128xf32>
    %20 = vector.shape_cast %19 : vector<1x8x128xf32> to vector<8x128xf32>
    %21 = arith.mulf %20, %7 : vector<8x128xf32>
    %22 = arith.addf %18, %21 : vector<8x128xf32>
    %c64_i32 = arith.constant 64 : i32
    %23 = tpu.dynamic_rotate %22 by %c64_i32 dim 1 : vector<8x128xf32>, i32 -> vector<8x128xf32>
    %24 = arith.addf %22, %23 : vector<8x128xf32>
    %c32_i32 = arith.constant 32 : i32
    %25 = tpu.dynamic_rotate %24 by %c32_i32 dim 1 : vector<8x128xf32>, i32 -> vector<8x128xf32>
    %26 = arith.addf %24, %25 : vector<8x128xf32>
    %c16_i32 = arith.constant 16 : i32
    %27 = tpu.dynamic_rotate %26 by %c16_i32 dim 1 : vector<8x128xf32>, i32 -> vector<8x128xf32>
    %28 = arith.addf %26, %27 : vector<8x128xf32>
    %29 = vector.extract_strided_slice %28 {offsets = [0, 0], sizes = [8, 32], strides = [1, 1]} : vector<8x128xf32> to vector<8x32xf32>
    %c5 = arith.constant 5 : index
    %c0_20 = arith.constant 0 : index
    %c0_21 = arith.constant 0 : index
    %30 = vector.load %arg1[%c5, %c0_20, %c0_21] : memref<16x8x128xf32, #tpu.memory_space<vmem>>, vector<1x8x128xf32>
    %31 = vector.shape_cast %30 : vector<1x8x128xf32> to vector<8x128xf32>
    %32 = arith.mulf %31, %3 : vector<8x128xf32>
    %c6 = arith.constant 6 : index
    %c0_22 = arith.constant 0 : index
    %c0_23 = arith.constant 0 : index
    %33 = vector.load %arg1[%c6, %c0_22, %c0_23] : memref<16x8x128xf32, #tpu.memory_space<vmem>>, vector<1x8x128xf32>
    %34 = vector.shape_cast %33 : vector<1x8x128xf32> to vector<8x128xf32>
    %35 = arith.mulf %34, %5 : vector<8x128xf32>
    %36 = arith.addf %32, %35 : vector<8x128xf32>
    %c7 = arith.constant 7 : index
    %c0_24 = arith.constant 0 : index
    %c0_25 = arith.constant 0 : index
    %37 = vector.load %arg1[%c7, %c0_24, %c0_25] : memref<16x8x128xf32, #tpu.memory_space<vmem>>, vector<1x8x128xf32>
    %38 = vector.shape_cast %37 : vector<1x8x128xf32> to vector<8x128xf32>
    %39 = arith.mulf %38, %7 : vector<8x128xf32>
    %40 = arith.addf %36, %39 : vector<8x128xf32>
    %c64_i32_26 = arith.constant 64 : i32
    %41 = tpu.dynamic_rotate %40 by %c64_i32_26 dim 1 : vector<8x128xf32>, i32 -> vector<8x128xf32>
    %42 = arith.addf %40, %41 : vector<8x128xf32>
    %c32_i32_27 = arith.constant 32 : i32
    %43 = tpu.dynamic_rotate %42 by %c32_i32_27 dim 1 : vector<8x128xf32>, i32 -> vector<8x128xf32>
    %44 = arith.addf %42, %43 : vector<8x128xf32>
    %c16_i32_28 = arith.constant 16 : i32
    %45 = tpu.dynamic_rotate %44 by %c16_i32_28 dim 1 : vector<8x128xf32>, i32 -> vector<8x128xf32>
    %46 = arith.addf %44, %45 : vector<8x128xf32>
    %47 = vector.extract_strided_slice %46 {offsets = [0, 32], sizes = [8, 32], strides = [1, 1]} : vector<8x128xf32> to vector<8x32xf32>
    %c8 = arith.constant 8 : index
    %c0_29 = arith.constant 0 : index
    %c0_30 = arith.constant 0 : index
    %48 = vector.load %arg1[%c8, %c0_29, %c0_30] : memref<16x8x128xf32, #tpu.memory_space<vmem>>, vector<1x8x128xf32>
    %49 = vector.shape_cast %48 : vector<1x8x128xf32> to vector<8x128xf32>
    %50 = arith.mulf %49, %1 : vector<8x128xf32>
    %c9 = arith.constant 9 : index
    %c0_31 = arith.constant 0 : index
    %c0_32 = arith.constant 0 : index
    %51 = vector.load %arg1[%c9, %c0_31, %c0_32] : memref<16x8x128xf32, #tpu.memory_space<vmem>>, vector<1x8x128xf32>
    %52 = vector.shape_cast %51 : vector<1x8x128xf32> to vector<8x128xf32>
    %53 = arith.mulf %52, %3 : vector<8x128xf32>
    %54 = arith.addf %50, %53 : vector<8x128xf32>
    %c10 = arith.constant 10 : index
    %c0_33 = arith.constant 0 : index
    %c0_34 = arith.constant 0 : index
    %55 = vector.load %arg1[%c10, %c0_33, %c0_34] : memref<16x8x128xf32, #tpu.memory_space<vmem>>, vector<1x8x128xf32>
    %56 = vector.shape_cast %55 : vector<1x8x128xf32> to vector<8x128xf32>
    %57 = arith.mulf %56, %5 : vector<8x128xf32>
    %58 = arith.addf %54, %57 : vector<8x128xf32>
    %c11 = arith.constant 11 : index
    %c0_35 = arith.constant 0 : index
    %c0_36 = arith.constant 0 : index
    %59 = vector.load %arg1[%c11, %c0_35, %c0_36] : memref<16x8x128xf32, #tpu.memory_space<vmem>>, vector<1x8x128xf32>
    %60 = vector.shape_cast %59 : vector<1x8x128xf32> to vector<8x128xf32>
    %61 = arith.mulf %60, %7 : vector<8x128xf32>
    %62 = arith.addf %58, %61 : vector<8x128xf32>
    %c64_i32_37 = arith.constant 64 : i32
    %63 = tpu.dynamic_rotate %62 by %c64_i32_37 dim 1 : vector<8x128xf32>, i32 -> vector<8x128xf32>
    %64 = arith.addf %62, %63 : vector<8x128xf32>
    %c32_i32_38 = arith.constant 32 : i32
    %65 = tpu.dynamic_rotate %64 by %c32_i32_38 dim 1 : vector<8x128xf32>, i32 -> vector<8x128xf32>
    %66 = arith.addf %64, %65 : vector<8x128xf32>
    %c16_i32_39 = arith.constant 16 : i32
    %67 = tpu.dynamic_rotate %66 by %c16_i32_39 dim 1 : vector<8x128xf32>, i32 -> vector<8x128xf32>
    %68 = arith.addf %66, %67 : vector<8x128xf32>
    %69 = vector.extract_strided_slice %68 {offsets = [0, 64], sizes = [8, 32], strides = [1, 1]} : vector<8x128xf32> to vector<8x32xf32>
    %c13 = arith.constant 13 : index
    %c0_40 = arith.constant 0 : index
    %c0_41 = arith.constant 0 : index
    %70 = vector.load %arg1[%c13, %c0_40, %c0_41] : memref<16x8x128xf32, #tpu.memory_space<vmem>>, vector<1x8x128xf32>
    %71 = vector.shape_cast %70 : vector<1x8x128xf32> to vector<8x128xf32>
    %72 = arith.mulf %71, %3 : vector<8x128xf32>
    %c14 = arith.constant 14 : index
    %c0_42 = arith.constant 0 : index
    %c0_43 = arith.constant 0 : index
    %73 = vector.load %arg1[%c14, %c0_42, %c0_43] : memref<16x8x128xf32, #tpu.memory_space<vmem>>, vector<1x8x128xf32>
    %74 = vector.shape_cast %73 : vector<1x8x128xf32> to vector<8x128xf32>
    %75 = arith.mulf %74, %5 : vector<8x128xf32>
    %76 = arith.addf %72, %75 : vector<8x128xf32>
    %c15 = arith.constant 15 : index
    %c0_44 = arith.constant 0 : index
    %c0_45 = arith.constant 0 : index
    %77 = vector.load %arg1[%c15, %c0_44, %c0_45] : memref<16x8x128xf32, #tpu.memory_space<vmem>>, vector<1x8x128xf32>
    %78 = vector.shape_cast %77 : vector<1x8x128xf32> to vector<8x128xf32>
    %79 = arith.mulf %78, %7 : vector<8x128xf32>
    %80 = arith.addf %76, %79 : vector<8x128xf32>
    %c64_i32_46 = arith.constant 64 : i32
    %81 = tpu.dynamic_rotate %80 by %c64_i32_46 dim 1 : vector<8x128xf32>, i32 -> vector<8x128xf32>
    %82 = arith.addf %80, %81 : vector<8x128xf32>
    %c32_i32_47 = arith.constant 32 : i32
    %83 = tpu.dynamic_rotate %82 by %c32_i32_47 dim 1 : vector<8x128xf32>, i32 -> vector<8x128xf32>
    %84 = arith.addf %82, %83 : vector<8x128xf32>
    %c16_i32_48 = arith.constant 16 : i32
    %85 = tpu.dynamic_rotate %84 by %c16_i32_48 dim 1 : vector<8x128xf32>, i32 -> vector<8x128xf32>
    %86 = arith.addf %84, %85 : vector<8x128xf32>
    %87 = vector.extract_strided_slice %86 {offsets = [0, 96], sizes = [8, 32], strides = [1, 1]} : vector<8x128xf32> to vector<8x32xf32>
    %88 = tpu.concatenate %29, %47, %69, %87 in 1 : vector<8x32xf32>, vector<8x32xf32>, vector<8x32xf32>, vector<8x32xf32> -> vector<8x128xf32>
    %c0_49 = arith.constant 0 : index
    %89 = memref.load %arg2[%c0_49] : memref<1xf32, #tpu.memory_space<smem>>
    %90 = vector.broadcast %89 : f32 to vector<8x128xf32>
    %91 = arith.addf %88, %90 : vector<8x128xf32>
    %92 = math.tanh %91 : vector<8x128xf32>
    %c0_50 = arith.constant 0 : index
    %c0_51 = arith.constant 0 : index
    %93 = vector.load %arg3[%c0_50, %c0_51] : memref<8x128xf32, #tpu.memory_space<vmem>>, vector<8x128xf32>
    tpu.vector_store %arg3[%c0_50, %c0_51], %92 {strides = array<i32>} : memref<8x128xf32, #tpu.memory_space<vmem>>, vector<8x128xf32>,
    return
  }
}

</mosaic_0001>

<llo_original>
// kernel: model_forward.1
$region0: #{model_forward.1}
  #allocation0 [shape = 'u32[]', space=smem, size = 0x4, offset = 0x4, fixed_abs, tag = 'smem constant byte address 0x4 - core index']
  #allocation1 [shape = 'u32[144,128]{1,0:T(1,128)}', space=vmem, size = 0x12000, scoped, tag = 'internal scratch']
  #allocation2 [shape = 'f32[1]{0:T(128)S(6)}', space=smem, size = 0x200, scoped, tag = 'scoped memory for model_forward.1']
  %s0 = inlined_call_operand.vmem [shape: f32[4,8,128], index: 0, kind: input, shape index: {}]
  %s1 = inlined_call_operand.vmem [shape: f32[16,8,128], index: 1, kind: input, shape index: {}]
  %s2 = inlined_call_operand.<no memory space> [shape: f32[1], index: 2, kind: input, shape index: {}]
  %s3 = inlined_call_operand.vmem [shape: f32[8,128], index: 3, kind: output, shape index: {}]
  %s4 = sld [smem:[#allocation0]]
  $region22: #{model_forward.1} parent=0
    _
  %s6 = ssub.s32 1, %s4
  %s7 = scalar_select 0, %s6, %s4
  %8 = sst [smem:[#allocation2]] %s2
  // Predicated region
  $region2: #{model_forward.1} parent=0 // pred_check
    _
  $region3: #{model_forward.1} parent=0 // pred_check_branch
    %10 = sbr.rel (0) target = $region5
  $region4: #{model_forward.1} parent=0 // pred_region
    _
  $region5: #{model_forward.1} parent=0 // pred_fallthru
    _
  // Predicated region
  $region6: #{model_forward.1} parent=0 // pred_check
    _
  $region7: #{model_forward.1} parent=0 // pred_check_branch
    %12 = sbr.rel (0) target = $region9
  $region8: #{model_forward.1} parent=0 // pred_region
    _
  $region9: #{model_forward.1} parent=0 // pred_fallthru
    _
  // Predicated region
  $region10: #{model_forward.1} parent=0 // pred_check
    _
  $region11: #{model_forward.1} parent=0 // pred_check_branch
    %14 = sbr.rel (0) target = $region13
  $region12: #{model_forward.1} parent=0 // pred_region
    _
  $region13: #{model_forward.1} parent=0 // pred_fallthru
    _
  %v15 = vld [vmem:[%s0] sm:$0xff]
  %s16 = scalar_lea.vmem %s0, 8
  %v17 = vld [vmem:[%s16] sm:$0xff]
  %s18 = scalar_lea.vmem %s0, 16
  %v19 = vld [vmem:[%s18] sm:$0xff]
  %s20 = scalar_lea.vmem %s0, 24
  %v21 = vld [vmem:[%s20] sm:$0xff]
  %v22 = vld [vmem:[%s1] sm:$0xff]
  %v23 = vmul.f32 %v22, %v15
  %s24 = scalar_lea.vmem %s1, 8
  %v25 = vld [vmem:[%s24] sm:$0xff]
  %v26 = vmul.f32 %v25, %v17
  %v27 = vadd.f32 %v23, %v26
  %s28 = scalar_lea.vmem %s1, 16
  %v29 = vld [vmem:[%s28] sm:$0xff]
  %v30 = vmul.f32 %v29, %v19
  %v31 = vadd.f32 %v27, %v30
  %s32 = scalar_lea.vmem %s1, 24
  %v33 = vld [vmem:[%s32] sm:$0xff]
  %v34 = vmul.f32 %v33, %v21
  %v35 = vadd.f32 %v31, %v34
  %36 = vrot.lane.b32.xlu0 %v35, 64
  %v37 = vpop.permute.xlu0 %36
  %v38 = vadd.f32 %v35, %v37
  %39 = vrot.lane.b32.xlu0 %v38, 32
  %v40 = vpop.permute.xlu0 %39
  %v41 = vadd.f32 %v38, %v40
  %42 = vrot.lane.b32.xlu0 %v41, 16
  %v43 = vpop.permute.xlu0 %42
  %v44 = vadd.f32 %v41, %v43
  %s45 = scalar_lea.vmem %s1, 40
  %v46 = vld [vmem:[%s45] sm:$0xff]
  %v47 = vmul.f32 %v46, %v17
  %s48 = scalar_lea.vmem %s1, 48
  %v49 = vld [vmem:[%s48] sm:$0xff]
  %v50 = vmul.f32 %v49, %v19
  %v51 = vadd.f32 %v47, %v50
  %s52 = scalar_lea.vmem %s1, 56
  %v53 = vld [vmem:[%s52] sm:$0xff]
  %v54 = vmul.f32 %v53, %v21
  %v55 = vadd.f32 %v51, %v54
  %56 = vrot.lane.b32.xlu0 %v55, 64
  %v57 = vpop.permute.xlu0 %56
  %v58 = vadd.f32 %v55, %v57
  %59 = vrot.lane.b32.xlu0 %v58, 32
  %v60 = vpop.permute.xlu0 %59
  %v61 = vadd.f32 %v58, %v60
  %62 = vrot.lane.b32.xlu0 %v61, 16
  %v63 = vpop.permute.xlu0 %62
  %v64 = vadd.f32 %v61, %v63
  %s65 = scalar_lea.vmem %s1, 64
  %v66 = vld [vmem:[%s65] sm:$0xff]
  %v67 = vmul.f32 %v66, %v15
  %s68 = scalar_lea.vmem %s1, 72
  %v69 = vld [vmem:[%s68] sm:$0xff]
  %v70 = vmul.f32 %v69, %v17
  %v71 = vadd.f32 %v67, %v70
  %s72 = scalar_lea.vmem %s1, 80
  %v73 = vld [vmem:[%s72] sm:$0xff]
  %v74 = vmul.f32 %v73, %v19
  %v75 = vadd.f32 %v71, %v74
  %s76 = scalar_lea.vmem %s1, 88
  %v77 = vld [vmem:[%s76] sm:$0xff]
  %v78 = vmul.f32 %v77, %v21
  %v79 = vadd.f32 %v75, %v78
  %80 = vrot.lane.b32.xlu0 %v79, 64
  %v81 = vpop.permute.xlu0 %80
  %v82 = vadd.f32 %v79, %v81
  %83 = vrot.lane.b32.xlu0 %v82, 32
  %v84 = vpop.permute.xlu0 %83
  %v85 = vadd.f32 %v82, %v84
  %86 = vrot.lane.b32.xlu0 %v85, 16
  %v87 = vpop.permute.xlu0 %86
  %v88 = vadd.f32 %v85, %v87
  %s89 = scalar_lea.vmem %s1, 104
  %v90 = vld [vmem:[%s89] sm:$0xff]
  %v91 = vmul.f32 %v90, %v17
  %s92 = scalar_lea.vmem %s1, 112
  %v93 = vld [vmem:[%s92] sm:$0xff]
  %v94 = vmul.f32 %v93, %v19
  %v95 = vadd.f32 %v91, %v94
  %s96 = scalar_lea.vmem %s1, 120
  %v97 = vld [vmem:[%s96] sm:$0xff]
  %v98 = vmul.f32 %v97, %v21
  %v99 = vadd.f32 %v95, %v98
  %100 = vrot.lane.b32.xlu0 %v99, 64
  %v101 = vpop.permute.xlu0 %100
  %v102 = vadd.f32 %v99, %v101
  %103 = vrot.lane.b32.xlu0 %v102, 32
  %v104 = vpop.permute.xlu0 %103
  %v105 = vadd.f32 %v102, %v104
  %106 = vrot.lane.b32.xlu0 %v105, 16
  %v107 = vpop.permute.xlu0 %106
  %v108 = vadd.f32 %v105, %v107
  %vm109 = vcmask 261120
  %v110 = vsel %vm109, %v44, %v64
  %vm111 = vcmask 523264
  %v112 = vsel %vm111, %v110, %v88
  %vm113 = vcmask 785408
  %v114 = vsel %vm113, %v112, %v108
  %s115 = sld [smem:[#allocation2]]
  %v116 = vstv %s115
  %v117 = vadd.f32 %v114, %v116
  %v118 = vtanh.pop %v117
  %119 = vst [vmem:[%s3] sm:$0xff] %v118
  // Predicated region
  $region14: #{model_forward.1} parent=0 // pred_check
    _
  $region15: #{model_forward.1} parent=0 // pred_check_branch
    %121 = sbr.rel (0) target = $region17
  $region16: #{model_forward.1} parent=0 // pred_region
    _
  $region17: #{model_forward.1} parent=0 // pred_fallthru
    _
  // Predicated region
  $region18: #{model_forward.1} parent=0 // pred_check
    _
  $region19: #{model_forward.1} parent=0 // pred_check_branch
    %123 = sbr.rel (0) target = $region21
  $region20: #{model_forward.1} parent=0 // pred_region
    _
  $region21: #{model_forward.1} parent=0 // pred_fallthru
    _

</llo_original>
